<compile_context>
chip_gen: v6e
topology: v6e:2x2x1
jax: 0.10.0
libtpu: 0.0.40
codegen_flags: <defaults>
</compile_context>

<pallas_src>
import functools

import jax
import jax.numpy as jnp
from jax.experimental import pallas as pl
from jax.experimental.pallas import tpu as pltpu


def _round_up(x: int, m: int) -> int:
    return ((x + m - 1) // m) * m


def _probe_kernel(x_ref, w_ref, b_ref, o_ref, acc_ref):
    # x_ref:   [tb, thw, C]   activation tile (C on lanes)
    # w_ref:   [C, N_pad]     weight.T already scaled by 1/(H*W)
    # b_ref:   [1, N_pad]     bias (zero-padded)
    # o_ref:   [tb, N_pad]    logits
    # acc_ref: [tb, C]        f32 partial spatial sums (persists across HW axis)
    s = pl.program_id(1)

    @pl.when(s == 0)
    def _():
        acc_ref[...] = jnp.zeros_like(acc_ref)

    # Partial sum over the spatial (sublane) axis, accumulated in f32.
    acc_ref[...] += jnp.sum(x_ref[...], axis=1, dtype=jnp.float32)

    @pl.when(s == pl.num_programs(1) - 1)
    def _():
        logits = jnp.dot(acc_ref[...], w_ref[...],
                         preferred_element_type=jnp.float32)
        o_ref[...] = (logits + b_ref[...]).astype(o_ref.dtype)


@functools.partial(jax.jit, static_argnames=("target_block_bytes",))
def conv_prober_forward(activation, weight, bias, *,
                        target_block_bytes: int = 2 * 1024 * 1024):
    """activation: [B, C, H, W] (NCHW), weight: [n_classes, C], bias: [n_classes]."""
    B, C, H, W = activation.shape
    n_classes = weight.shape[0]
    HW = H * W

    # --- layout plumbing in plain JAX: NCHW -> [B, HW, C] (C on lanes) ---
    x = jnp.transpose(activation, (0, 2, 3, 1)).reshape(B, HW, C)
    itemsize = jnp.dtype(x.dtype).itemsize

    # Batch tile: full batch if small, else 8 (keeps output block sublane-aligned).
    tb = B if B <= 8 else 8
    B_pad = _round_up(B, tb)

    # Spatial tile: multiple of 8, sized so one activation block ~= target bytes
    # (double-buffered by the pipeline -> well under v5e/v7x scoped VMEM limits).
    thw = max(8, (target_block_bytes // max(1, tb * C * itemsize)) // 8 * 8)
    thw = min(thw, _round_up(HW, 8))
    HW_pad = _round_up(HW, thw)

    # Zero-pad batch / spatial; zeros add nothing to the spatial sum.
    x = jnp.pad(x, ((0, B_pad - B), (0, HW_pad - HW), (0, 0)))

    # Fold the 1/(H*W) mean into the weight; pad classes to a lane-dense 128.
    N_pad = _round_up(n_classes, 128)
    w_t = (weight.T.astype(jnp.float32) / jnp.float32(HW))          # [C, n_classes]
    w_t = jnp.pad(w_t, ((0, 0), (0, N_pad - n_classes)))            # [C, N_pad]
    b2d = jnp.pad(bias.astype(jnp.float32).reshape(1, n_classes),
                  ((0, 0), (0, N_pad - n_classes)))                 # [1, N_pad]

    grid = (B_pad // tb, HW_pad // thw)

    cost = pl.CostEstimate(
        flops=int(B_pad * HW_pad * C + 2 * B_pad * C * N_pad),
        transcendentals=0,
        bytes_accessed=int(B_pad * HW_pad * C * itemsize
                           + C * N_pad * 4 + B_pad * N_pad * 4),
    )

    out = pl.pallas_call(
        _probe_kernel,
        out_shape=jax.ShapeDtypeStruct((B_pad, N_pad), jnp.float32),
        grid_spec=pltpu.PrefetchScalarGridSpec(
            num_scalar_prefetch=0,
            grid=grid,
            in_specs=[
                pl.BlockSpec((tb, thw, C), lambda b, s: (b, s, 0)),
                pl.BlockSpec((C, N_pad), lambda b, s: (0, 0)),
                pl.BlockSpec((1, N_pad), lambda b, s: (0, 0)),
            ],
            out_specs=pl.BlockSpec((tb, N_pad), lambda b, s: (b, 0)),
            scratch_shapes=[pltpu.VMEM((tb, C), jnp.float32)],
        ),
        compiler_params=pltpu.CompilerParams(
            dimension_semantics=("parallel", "arbitrary"),
            vmem_limit_bytes=32 * 1024 * 1024,
        ),
        cost_estimate=cost,
    )(x, w_t, b2d)

    return out[:B, :n_classes]


if __name__ == "__main__":
    # Small shapes consistent with the module's forward:
    # batch=2, hidden_size (channels) = 32, spatial 16x16, n_classes = 4.
    B, C, H, W = 2, 32, 16, 16
    n_classes = 4

    key = jax.random.PRNGKey(0)
    k_act, k_w, k_b = jax.random.split(key, 3)

    # Synthetic "internal activation" from the frozen backbone.
    activation = jax.random.normal(k_act, (B, C, H, W), dtype=jnp.float32)

    # Deterministic nn.Linear(hidden_size, n_classes) init (PyTorch default:
    # U(-1/sqrt(fan_in), 1/sqrt(fan_in))).
    bound = 1.0 / jnp.sqrt(jnp.float32(C))
    weight = jax.random.uniform(k_w, (n_classes, C), jnp.float32, -bound, bound)
    bias = jax.random.uniform(k_b, (n_classes,), jnp.float32, -bound, bound)

    # Pure-JAX reference.
    ref = jnp.mean(activation, axis=(2, 3)) @ weight.T + bias

    # 1) Default tiling (single HW tile at this toy size).
    out = conv_prober_forward(activation, weight, bias)
    out = jax.block_until_ready(out)
    assert out.shape == (B, n_classes)
    assert jnp.allclose(out, ref, atol=1e-4, rtol=1e-4), "mismatch (default tiles)"

    # 2) Tiny blocks to force a multi-step spatial accumulation (exercises the
    #    "arbitrary" reduction axis + VMEM accumulator path).
    out2 = conv_prober_forward(activation, weight, bias,
                               target_block_bytes=8 * 1024)
    out2 = jax.block_until_ready(out2)
    assert jnp.allclose(out2, ref, atol=1e-4, rtol=1e-4), "mismatch (tiled reduction)"

    print("KERNEL_OK")
</pallas_src>

<mosaic_0001>
module attributes {stable_mosaic.version = 11 : i64} {
  func.func @_probe_kernel(%arg0: i32, %arg1: i32, %arg2: memref<2x256x32xf32, #tpu.memory_space<vmem>>, %arg3: memref<32x128xf32, #tpu.memory_space<vmem>>, %arg4: memref<1x128xf32, #tpu.memory_space<vmem>>, %arg5: memref<2x128xf32, #tpu.memory_space<vmem>>, %arg6: memref<2x32xf32, #tpu.memory_space<vmem>>) attributes {dimension_semantics = [#tpu.dimension_semantics<parallel>, #tpu.dimension_semantics<arbitrary>], iteration_bounds = array<i64: 1, 1>, scalar_prefetch = 0 : i64, scratch_operands = 1 : i64, tpu.core_type = #tpu.core_type<tc>, window_params = [{transform_indices = @transform_0, window_bounds = array<i64: 2, 256, 32>}, {pipeline_mode = #tpu.pipeline_mode<synchronous>, transform_indices = @transform_1, window_bounds = array<i64: 32, 128>}, {pipeline_mode = #tpu.pipeline_mode<synchronous>, transform_indices = @transform_2, window_bounds = array<i64: 1, 128>}, {transform_indices = @transform_3, window_bounds = array<i64: 2, 128>}]} {
    %c0_i32 = arith.constant 0 : i32
    %0 = arith.cmpi eq, %arg1, %c0_i32 : i32
    %1 = arith.extui %0 : i1 to i32
    %c0_i32_0 = arith.constant 0 : i32
    %2 = arith.cmpi ne, %1, %c0_i32_0 : i32
    scf.if %2 {
      %cst_9 = arith.constant 0.000000e+00 : f32
      %11 = vector.broadcast %cst_9 : f32 to vector<2x32xf32>
      %c0_10 = arith.constant 0 : index
      %c0_11 = arith.constant 0 : index
      %12 = vector.load %arg6[%c0_10, %c0_11] : memref<2x32xf32, #tpu.memory_space<vmem>>, vector<2x32xf32>
      tpu.vector_store %arg6[%c0_10, %c0_11], %11 {strides = array<i32>} : memref<2x32xf32, #tpu.memory_space<vmem>>, vector<2x32xf32>,
    } else {
    }
    %c0 = arith.constant 0 : index
    %c0_1 = arith.constant 0 : index
    %3 = vector.load %arg6[%c0, %c0_1] : memref<2x32xf32, #tpu.memory_space<vmem>>, vector<2x32xf32>
    %c0_2 = arith.constant 0 : index
    %c0_3 = arith.constant 0 : index
    %c0_4 = arith.constant 0 : index
    %4 = vector.load %arg2[%c0_2, %c0_3, %c0_4] : memref<2x256x32xf32, #tpu.memory_space<vmem>>, vector<2x256x32xf32>
    %cst = arith.constant dense<0.000000e+00> : vector<2x32xf32>
    %5 = vector.multi_reduction <add>, %4, %cst [1] : vector<2x256x32xf32> to vector<2x32xf32>
    %6 = arith.addf %3, %5 : vector<2x32xf32>
    %c0_5 = arith.constant 0 : index
    %c0_6 = arith.constant 0 : index
    %7 = vector.load %arg6[%c0_5, %c0_6] : memref<2x32xf32, #tpu.memory_space<vmem>>, vector<2x32xf32>
    tpu.vector_store %arg6[%c0_5, %c0_6], %6 {strides = array<i32>} : memref<2x32xf32, #tpu.memory_space<vmem>>, vector<2x32xf32>,
    %c0_i32_7 = arith.constant 0 : i32
    %8 = arith.cmpi eq, %arg1, %c0_i32_7 : i32
    %9 = arith.extui %8 : i1 to i32
    %c0_i32_8 = arith.constant 0 : i32
    %10 = arith.cmpi ne, %9, %c0_i32_8 : i32
    scf.if %10 {
      %c0_9 = arith.constant 0 : index
      %c0_10 = arith.constant 0 : index
      %11 = vector.load %arg6[%c0_9, %c0_10] : memref<2x32xf32, #tpu.memory_space<vmem>>, vector<2x32xf32>
      %c0_11 = arith.constant 0 : index
      %c0_12 = arith.constant 0 : index
      %12 = vector.load %arg3[%c0_11, %c0_12] : memref<32x128xf32, #tpu.memory_space<vmem>>, vector<32x128xf32>
      %cst_13 = arith.constant dense<0.000000e+00> : vector<2x128xf32>
      %13 = tpu.matmul %11, %12, %cst_13 {dimension_numbers = #tpu.dot_dimension_numbers<[1], [0], [0], [1], [0, 0, 1, 1], [], []>} : vector<2x32xf32>, vector<32x128xf32>, vector<2x128xf32> -> vector<2x128xf32>
      %c0_14 = arith.constant 0 : index
      %c0_15 = arith.constant 0 : index
      %14 = vector.load %arg4[%c0_14, %c0_15] : memref<1x128xf32, #tpu.memory_space<vmem>>, vector<1x128xf32>
      %15 = vector.broadcast %14 : vector<1x128xf32> to vector<2x128xf32>
      %16 = arith.addf %13, %15 : vector<2x128xf32>
      %c0_16 = arith.constant 0 : index
      %c0_17 = arith.constant 0 : index
      %17 = vector.load %arg5[%c0_16, %c0_17] : memref<2x128xf32, #tpu.memory_space<vmem>>, vector<2x128xf32>
      tpu.vector_store %arg5[%c0_16, %c0_17], %16 {strides = array<i32>} : memref<2x128xf32, #tpu.memory_space<vmem>>, vector<2x128xf32>,
    } else {
    }
    return
  }
  func.func @transform_0(%arg0: i32, %arg1: i32) -> (i32, i32, i32) {
    %c0_i32 = arith.constant 0 : i32
    %c0_i32_0 = arith.constant 0 : i32
    return %arg0, %arg1, %c0_i32 : i32, i32, i32
  }
  func.func @transform_1(%arg0: i32, %arg1: i32) -> (i32, i32) {
    %c0_i32 = arith.constant 0 : i32
    %c0_i32_0 = arith.constant 0 : i32
    %c0_i32_1 = arith.constant 0 : i32
    return %c0_i32, %c0_i32_0 : i32, i32
  }
  func.func @transform_2(%arg0: i32, %arg1: i32) -> (i32, i32) {
    %c0_i32 = arith.constant 0 : i32
    %c0_i32_0 = arith.constant 0 : i32
    %c0_i32_1 = arith.constant 0 : i32
    return %c0_i32, %c0_i32_0 : i32, i32
  }
  func.func @transform_3(%arg0: i32, %arg1: i32) -> (i32, i32) {
    %c0_i32 = arith.constant 0 : i32
    %c0_i32_0 = arith.constant 0 : i32
    return %arg0, %c0_i32 : i32, i32
  }
}

</mosaic_0001>

<llo_original>
// kernel: conv_prober_forward.1
$region0: #{conv_prober_forward.1}
  #allocation0 [shape = 'u32[]', space=smem, size = 0x4, offset = 0x4, fixed_abs, tag = 'smem constant byte address 0x4 - core index']
  #allocation1 [shape = 'u32[144,128]{1,0:T(1,128)}', space=vmem, size = 0x12000, scoped, tag = 'internal scratch']
  #allocation2 [shape = 'f32[2,32]{1,0:T(2,128)}', space=vmem, size = 0x400, scoped, tag = 'scratch operand']
  %s0 = inlined_call_operand.hbm [shape: f32[2,256,32], index: 0, kind: input, shape index: {}]
  %s1 = inlined_call_operand.vmem [shape: f32[32,128], index: 1, kind: input, shape index: {}]
  %s2 = inlined_call_operand.vmem [shape: f32[1,128], index: 2, kind: input, shape index: {}]
  %s3 = inlined_call_operand.hbm [shape: f32[2,128], index: 3, kind: output, shape index: {}]
  %s4 = sld [smem:[#allocation0]]
  $region34: #{conv_prober_forward.1} parent=0
    _
  %s6 = ssub.s32 1, %s4
  %s7 = scalar_select 0, %s6, %s4
  $region1: #{conv_prober_forward.1} parent=0
    #allocation3 [shape = 'u8[262144]{0}', space=vmem, size = 0x40000, scoped, tag = 'input window, operand 0, single buffered']
    #allocation4 [shape = 's32[1]{0}', space=sflag, size = 0x4, scoped, tag = 'scoped memory for conv_prober_forward.1']
    #allocation5 [shape = 's32[1]{0}', space=sflag, size = 0x4, scoped, tag = 'scoped memory for conv_prober_forward.1']
    #allocation6 [shape = 'u8[1024]{0}', space=vmem, size = 0x400, scoped, tag = 'output window, operand 0, single buffered']
    %8 = vsyncpa [#allocation4], 0
    %9 = vsyncpa [#allocation5], 0
    // Predicated region
    $region2: #{conv_prober_forward.1} parent=1 // pred_check
      _
    $region3: #{conv_prober_forward.1} parent=1 // pred_check_branch
      %11 = sbr.rel (0) target = $region5
    $region4: #{conv_prober_forward.1} parent=1 // pred_region
      %s13 = ssub.s32 8192, 8192
      %14 = vsyncadd [#allocation4], %s13
      %s15 = sshll.u32 [#allocation3], 4
      %s16 = int_to_ptr.vmem [resolvable:$true] %s15
      %21 = dma.hbm_to_vmem [thread:$0]  %s0, 8192, %s16, [#allocation4], 128, 128, 8
    $region5: #{conv_prober_forward.1} parent=1 // pred_fallthru
      _
    // Predicated region
    $region6: #{conv_prober_forward.1} parent=1 // pred_check
      _
    $region7: #{conv_prober_forward.1} parent=1 // pred_check_branch
      %23 = sbr.rel (0) target = $region9
    $region8: #{conv_prober_forward.1} parent=1 // pred_region
      _
    $region9: #{conv_prober_forward.1} parent=1 // pred_fallthru
      _
    // Predicated region
    $region10: #{conv_prober_forward.1} parent=1 // pred_check
      _
    $region11: #{conv_prober_forward.1} parent=1 // pred_check_branch
      %25 = sbr.rel (0) target = $region13
    $region12: #{conv_prober_forward.1} parent=1 // pred_region
      _
    $region13: #{conv_prober_forward.1} parent=1 // pred_fallthru
      _
    // Predicated region
    $region14: #{conv_prober_forward.1} parent=1 // pred_check
      _
    $region15: #{conv_prober_forward.1} parent=1 // pred_check_branch
      %27 = sbr.rel (0) target = $region17
    $region16: #{conv_prober_forward.1} parent=1 // pred_region
      %28 = dma.done [#allocation4], 8192
    $region17: #{conv_prober_forward.1} parent=1 // pred_fallthru
      _
    %p29 = scmp.eq.s32.totalorder 0, 0
    // Predicated region
    $region18: #{conv_prober_forward.1} parent=1 // pred_check
      %p30 = pneg %p29
    $region19: #{conv_prober_forward.1} parent=1 // pred_check_branch
      %32 = sbr.rel (%p30) target = $region21
    $region20: #{conv_prober_forward.1} parent=1 // pred_region
      %vm33 = vcmask 254976
      %34 = vst.msk [vmem:[#allocation2] sm:$0x3] %vm33, 0.0
    $region21: #{conv_prober_forward.1} parent=1 // pred_fallthru
      _
    %v35 = vld [vmem:[#allocation2] sm:$0x3]
    %v36 = vld [vmem:[#allocation3] sm:$0xff]
    %v37 = vld [vmem:[#allocation3 + $0x8] sm:$0xff]
    %v38 = vld [vmem:[#allocation3 + $0x10] sm:$0xff]
    %v39 = vld [vmem:[#allocation3 + $0x18] sm:$0xff]
    %v40 = vld [vmem:[#allocation3 + $0x20] sm:$0xff]
    %v41 = vld [vmem:[#allocation3 + $0x28] sm:$0xff]
    %v42 = vld [vmem:[#allocation3 + $0x30] sm:$0xff]
    %v43 = vld [vmem:[#allocation3 + $0x38] sm:$0xff]
    %v44 = vld [vmem:[#allocation3 + $0x40] sm:$0xff]
    %v45 = vld [vmem:[#allocation3 + $0x48] sm:$0xff]
    %v46 = vld [vmem:[#allocation3 + $0x50] sm:$0xff]
    %v47 = vld [vmem:[#allocation3 + $0x58] sm:$0xff]
    %v48 = vld [vmem:[#allocation3 + $0x60] sm:$0xff]
    %v49 = vld [vmem:[#allocation3 + $0x68] sm:$0xff]
    %v50 = vld [vmem:[#allocation3 + $0x70] sm:$0xff]
    %v51 = vld [vmem:[#allocation3 + $0x78] sm:$0xff]
    %v52 = vld [vmem:[#allocation3 + $0x80] sm:$0xff]
    %v53 = vld [vmem:[#allocation3 + $0x88] sm:$0xff]
    %v54 = vld [vmem:[#allocation3 + $0x90] sm:$0xff]
    %v55 = vld [vmem:[#allocation3 + $0x98] sm:$0xff]
    %v56 = vld [vmem:[#allocation3 + $0xa0] sm:$0xff]
    %v57 = vld [vmem:[#allocation3 + $0xa8] sm:$0xff]
    %v58 = vld [vmem:[#allocation3 + $0xb0] sm:$0xff]
    %v59 = vld [vmem:[#allocation3 + $0xb8] sm:$0xff]
    %v60 = vld [vmem:[#allocation3 + $0xc0] sm:$0xff]
    %v61 = vld [vmem:[#allocation3 + $0xc8] sm:$0xff]
    %v62 = vld [vmem:[#allocation3 + $0xd0] sm:$0xff]
    %v63 = vld [vmem:[#allocation3 + $0xd8] sm:$0xff]
    %v64 = vld [vmem:[#allocation3 + $0xe0] sm:$0xff]
    %v65 = vld [vmem:[#allocation3 + $0xe8] sm:$0xff]
    %v66 = vld [vmem:[#allocation3 + $0xf0] sm:$0xff]
    %v67 = vld [vmem:[#allocation3 + $0xf8] sm:$0xff]
    %v68 = vld [vmem:[#allocation3 + $0x100] sm:$0xff]
    %v69 = vld [vmem:[#allocation3 + $0x108] sm:$0xff]
    %v70 = vld [vmem:[#allocation3 + $0x110] sm:$0xff]
    %v71 = vld [vmem:[#allocation3 + $0x118] sm:$0xff]
    %v72 = vld [vmem:[#allocation3 + $0x120] sm:$0xff]
    %v73 = vld [vmem:[#allocation3 + $0x128] sm:$0xff]
    %v74 = vld [vmem:[#allocation3 + $0x130] sm:$0xff]
    %v75 = vld [vmem:[#allocation3 + $0x138] sm:$0xff]
    %v76 = vld [vmem:[#allocation3 + $0x140] sm:$0xff]
    %v77 = vld [vmem:[#allocation3 + $0x148] sm:$0xff]
    %v78 = vld [vmem:[#allocation3 + $0x150] sm:$0xff]
    %v79 = vld [vmem:[#allocation3 + $0x158] sm:$0xff]
    %v80 = vld [vmem:[#allocation3 + $0x160] sm:$0xff]
    %v81 = vld [vmem:[#allocation3 + $0x168] sm:$0xff]
    %v82 = vld [vmem:[#allocation3 + $0x170] sm:$0xff]
    %v83 = vld [vmem:[#allocation3 + $0x178] sm:$0xff]
    %v84 = vld [vmem:[#allocation3 + $0x180] sm:$0xff]
    %v85 = vld [vmem:[#allocation3 + $0x188] sm:$0xff]
    %v86 = vld [vmem:[#allocation3 + $0x190] sm:$0xff]
    %v87 = vld [vmem:[#allocation3 + $0x198] sm:$0xff]
    %v88 = vld [vmem:[#allocation3 + $0x1a0] sm:$0xff]
    %v89 = vld [vmem:[#allocation3 + $0x1a8] sm:$0xff]
    %v90 = vld [vmem:[#allocation3 + $0x1b0] sm:$0xff]
    %v91 = vld [vmem:[#allocation3 + $0x1b8] sm:$0xff]
    %v92 = vld [vmem:[#allocation3 + $0x1c0] sm:$0xff]
    %v93 = vld [vmem:[#allocation3 + $0x1c8] sm:$0xff]
    %v94 = vld [vmem:[#allocation3 + $0x1d0] sm:$0xff]
    %v95 = vld [vmem:[#allocation3 + $0x1d8] sm:$0xff]
    %v96 = vld [vmem:[#allocation3 + $0x1e0] sm:$0xff]
    %v97 = vld [vmem:[#allocation3 + $0x1e8] sm:$0xff]
    %v98 = vld [vmem:[#allocation3 + $0x1f0] sm:$0xff]
    %v99 = vld [vmem:[#allocation3 + $0x1f8] sm:$0xff]
    %vm100 = vcmask 261120
    %v101 = vsel %vm100, %v36, 0.0
    %v102 = vsel %vm100, %v37, 0.0
    %v103 = vadd.f32 %v101, %v102
    %v104 = vsel %vm100, %v38, 0.0
    %v105 = vadd.f32 %v103, %v104
    %v106 = vsel %vm100, %v39, 0.0
    %v107 = vadd.f32 %v105, %v106
    %v108 = vsel %vm100, %v40, 0.0
    %v109 = vadd.f32 %v107, %v108
    %v110 = vsel %vm100, %v41, 0.0
    %v111 = vadd.f32 %v109, %v110
    %v112 = vsel %vm100, %v42, 0.0
    %v113 = vadd.f32 %v111, %v112
    %v114 = vsel %vm100, %v43, 0.0
    %v115 = vadd.f32 %v113, %v114
    %v116 = vsel %vm100, %v44, 0.0
    %v117 = vadd.f32 %v115, %v116
    %v118 = vsel %vm100, %v45, 0.0
    %v119 = vadd.f32 %v117, %v118
    %v120 = vsel %vm100, %v46, 0.0
    %v121 = vadd.f32 %v119, %v120
    %v122 = vsel %vm100, %v47, 0.0
    %v123 = vadd.f32 %v121, %v122
    %v124 = vsel %vm100, %v48, 0.0
    %v125 = vadd.f32 %v123, %v124
    %v126 = vsel %vm100, %v49, 0.0
    %v127 = vadd.f32 %v125, %v126
    %v128 = vsel %vm100, %v50, 0.0
    %v129 = vadd.f32 %v127, %v128
    %v130 = vsel %vm100, %v51, 0.0
    %v131 = vadd.f32 %v129, %v130
    %v132 = vsel %vm100, %v52, 0.0
    %v133 = vadd.f32 %v131, %v132
    %v134 = vsel %vm100, %v53, 0.0
    %v135 = vadd.f32 %v133, %v134
    %v136 = vsel %vm100, %v54, 0.0
    %v137 = vadd.f32 %v135, %v136
    %v138 = vsel %vm100, %v55, 0.0
    %v139 = vadd.f32 %v137, %v138
    %v140 = vsel %vm100, %v56, 0.0
    %v141 = vadd.f32 %v139, %v140
    %v142 = vsel %vm100, %v57, 0.0
    %v143 = vadd.f32 %v141, %v142
    %v144 = vsel %vm100, %v58, 0.0
    %v145 = vadd.f32 %v143, %v144
    %v146 = vsel %vm100, %v59, 0.0
    %v147 = vadd.f32 %v145, %v146
    %v148 = vsel %vm100, %v60, 0.0
    %v149 = vadd.f32 %v147, %v148
    %v150 = vsel %vm100, %v61, 0.0
    %v151 = vadd.f32 %v149, %v150
    %v152 = vsel %vm100, %v62, 0.0
    %v153 = vadd.f32 %v151, %v152
    %v154 = vsel %vm100, %v63, 0.0
    %v155 = vadd.f32 %v153, %v154
    %v156 = vsel %vm100, %v64, 0.0
    %v157 = vadd.f32 %v155, %v156
    %v158 = vsel %vm100, %v65, 0.0
    %v159 = vadd.f32 %v157, %v158
    %v160 = vsel %vm100, %v66, 0.0
    %v161 = vadd.f32 %v159, %v160
    %v162 = vsel %vm100, %v67, 0.0
    %v163 = vadd.f32 %v161, %v162
    %v164 = vrot.slane %v163, 4
    %v165 = vadd.f32 %v163, %v164
    %v166 = vrot.slane %v165, 2
    %v167 = vadd.f32 %v165, %v166
    %v168 = vrot.slane %v167, 1
    %v169 = vadd.f32 %v167, %v168
    %v170 = vsel %vm100, %v68, 0.0
    %v171 = vsel %vm100, %v69, 0.0
    %v172 = vadd.f32 %v170, %v171
    %v173 = vsel %vm100, %v70, 0.0
    %v174 = vadd.f32 %v172, %v173
    %v175 = vsel %vm100, %v71, 0.0
    %v176 = vadd.f32 %v174, %v175
    %v177 = vsel %vm100, %v72, 0.0
    %v178 = vadd.f32 %v176, %v177
    %v179 = vsel %vm100, %v73, 0.0
    %v180 = vadd.f32 %v178, %v179
    %v181 = vsel %vm100, %v74, 0.0
    %v182 = vadd.f32 %v180, %v181
    %v183 = vsel %vm100, %v75, 0.0
    %v184 = vadd.f32 %v182, %v183
    %v185 = vsel %vm100, %v76, 0.0
    %v186 = vadd.f32 %v184, %v185
    %v187 = vsel %vm100, %v77, 0.0
    %v188 = vadd.f32 %v186, %v187
    %v189 = vsel %vm100, %v78, 0.0
    %v190 = vadd.f32 %v188, %v189
    %v191 = vsel %vm100, %v79, 0.0
    %v192 = vadd.f32 %v190, %v191
    %v193 = vsel %vm100, %v80, 0.0
    %v194 = vadd.f32 %v192, %v193
    %v195 = vsel %vm100, %v81, 0.0
    %v196 = vadd.f32 %v194, %v195
    %v197 = vsel %vm100, %v82, 0.0
    %v198 = vadd.f32 %v196, %v197
    %v199 = vsel %vm100, %v83, 0.0
    %v200 = vadd.f32 %v198, %v199
    %v201 = vsel %vm100, %v84, 0.0
    %v202 = vadd.f32 %v200, %v201
    %v203 = vsel %vm100, %v85, 0.0
    %v204 = vadd.f32 %v202, %v203
    %v205 = vsel %vm100, %v86, 0.0
    %v206 = vadd.f32 %v204, %v205
    %v207 = vsel %vm100, %v87, 0.0
    %v208 = vadd.f32 %v206, %v207
    %v209 = vsel %vm100, %v88, 0.0
    %v210 = vadd.f32 %v208, %v209
    %v211 = vsel %vm100, %v89, 0.0
    %v212 = vadd.f32 %v210, %v211
    %v213 = vsel %vm100, %v90, 0.0
    %v214 = vadd.f32 %v212, %v213
    %v215 = vsel %vm100, %v91, 0.0
    %v216 = vadd.f32 %v214, %v215
    %v217 = vsel %vm100, %v92, 0.0
    %v218 = vadd.f32 %v216, %v217
    %v219 = vsel %vm100, %v93, 0.0
    %v220 = vadd.f32 %v218, %v219
    %v221 = vsel %vm100, %v94, 0.0
    %v222 = vadd.f32 %v220, %v221
    %v223 = vsel %vm100, %v95, 0.0
    %v224 = vadd.f32 %v222, %v223
    %v225 = vsel %vm100, %v96, 0.0
    %v226 = vadd.f32 %v224, %v225
    %v227 = vsel %vm100, %v97, 0.0
    %v228 = vadd.f32 %v226, %v227
    %v229 = vsel %vm100, %v98, 0.0
    %v230 = vadd.f32 %v228, %v229
    %v231 = vsel %vm100, %v99, 0.0
    %v232 = vadd.f32 %v230, %v231
    %v233 = vrot.slane %v232, 4
    %v234 = vadd.f32 %v232, %v233
    %v235 = vrot.slane %v234, 2
    %v236 = vadd.f32 %v234, %v235
    %v237 = vrot.slane %v236, 1
    %v238 = vadd.f32 %v236, %v237
    %vm241 = vcmask 1041409
    %v242 = vsel %vm241, %v238, %v169
    %v244 = vadd.f32 %v35, %v242
    %vm245 = vcmask 254976
    %246 = vst.msk [vmem:[#allocation2] sm:$0x3] %vm245, %v244
    // Predicated region
    $region22: #{conv_prober_forward.1} parent=1 // pred_check
      %p247 = pneg %p29
    $region23: #{conv_prober_forward.1} parent=1 // pred_check_branch
      %249 = sbr.rel (%p247) target = $region25
    $region24: #{conv_prober_forward.1} parent=1 // pred_region
      %v250 = vld [vmem:[#allocation2] sm:$0x3]
      %v251 = vld [vmem:[%s1] sm:$0xff]
      %v252 = vld [vmem:[%s1 + $0x8] sm:$0xff]
      %v253 = vld [vmem:[%s1 + $0x10] sm:$0xff]
      %v254 = vld [vmem:[%s1 + $0x18] sm:$0xff]
      %v255 = vld [vmem:[%s2] sm:$0x1]
      %v257 = vlaneseq
      %v258 = vshrl.u32 %v257, 7
      %v259 = vsub.s32 0, %v258
      %v260 = vrot.slane %v255, %v259
      %v263 = vsel %vm100, %v250, 0
      %265 = vmatprep.subr.mxu0 0.0
      %266 = vmatpush1.msra.mxu0 0.0
      %267 = vmatprep.subr.mxu0 0.0
      %268 = vmatpush1.msra.mxu0 0.0
      %269 = vmatprep.subr.mxu0 0.0
      %270 = vmatpush1.msra.mxu0 0.0
      %271 = vmatprep.subr.mxu0 0.0
      %272 = vmatpush1.msra.mxu0 0.0
      %273 = vmatprep.subr.mxu0 0.0
      %274 = vmatpush1.msra.mxu0 0.0
      %275 = vmatprep.subr.mxu0 0.0
      %276 = vmatpush1.msra.mxu0 0.0
      %277 = vmatprep.subr.mxu0 0.0
      %278 = vmatpush1.msra.mxu0 0.0
      %279 = vmatprep.subr.mxu0 0.0
      %280 = vmatpush1.msra.mxu0 0.0
      %281 = vmatprep.subr.mxu0 0.0
      %282 = vmatpush1.msra.mxu0 0.0
      %283 = vmatprep.subr.mxu0 0.0
      %284 = vmatpush1.msra.mxu0 0.0
      %285 = vmatprep.subr.mxu0 0.0
      %286 = vmatpush1.msra.mxu0 0.0
      %287 = vmatprep.subr.mxu0 0.0
      %288 = vmatpush1.msra.mxu0 0.0
      %289 = vmatprep.subr.mxu0 0.0
      %290 = vmatpush1.msra.mxu0 %v254
      %291 = vmatprep.subr.mxu0 0.0
      %292 = vmatpush1.msra.mxu0 %v253
      %293 = vmatprep.subr.mxu0 0.0
      %294 = vmatpush1.msra.mxu0 %v252
      %295 = vmatprep.subr.mxu0 0.0
      %296 = vmatpush1.msra.mxu0 %v251
      %297 = vmatprep.subr.mxu0 0.0
      %298 = vmatpush2.msra.mxu0 0.0
      %299 = vmatprep.subr.mxu0 0.0
      %300 = vmatpush2.msra.mxu0 0.0
      %301 = vmatprep.subr.mxu0 0.0
      %302 = vmatpush2.msra.mxu0 0.0
      %303 = vmatprep.subr.mxu0 0.0
      %304 = vmatpush2.msra.mxu0 0.0
      %305 = vmatprep.subr.mxu0 0.0
      %306 = vmatpush2.msra.mxu0 0.0
      %307 = vmatprep.subr.mxu0 0.0
      %308 = vmatpush2.msra.mxu0 0.0
      %309 = vmatprep.subr.mxu0 0.0
      %310 = vmatpush2.msra.mxu0 0.0
      %311 = vmatprep.subr.mxu0 0.0
      %312 = vmatpush2.msra.mxu0 0.0
      %313 = vmatprep.subr.mxu0 0.0
      %314 = vmatpush2.msra.mxu0 0.0
      %315 = vmatprep.subr.mxu0 0.0
      %316 = vmatpush2.msra.mxu0 0.0
      %317 = vmatprep.subr.mxu0 0.0
      %318 = vmatpush2.msra.mxu0 0.0
      %319 = vmatprep.subr.mxu0 0.0
      %320 = vmatpush2.msra.mxu0 0.0
      %321 = vmatprep.subr.mxu0 0.0
      %322 = vmatpush2.msra.mxu0 0.0
      %323 = vmatprep.subr.mxu0 0.0
      %324 = vmatpush2.msra.mxu0 0.0
      %325 = vmatprep.subr.mxu0 0.0
      %326 = vmatpush2.msra.mxu0 0.0
      %327 = vmatprep.subr.mxu0 0.0
      %328 = vmatpush2.msra.mxu0 0.0
      %329 = vmatprep.mubr.f32.mxu0 0.0
      %330 = vmatmul.mubr.f32.gmra.mxu0 %v263
      %v331 = vpop.f32.mrf.mxu0
      %v332 = vadd.f32 %v260, %v331
      %v333 = vpop.f32.mrf.mxu0
      %334 = vdwg.mxu0
      %335 = vst [vmem:[#allocation6] sm:$0x3] %v332
    $region25: #{conv_prober_forward.1} parent=1 // pred_fallthru
      _
    // Predicated region
    $region26: #{conv_prober_forward.1} parent=1 // pred_check
      _
    $region27: #{conv_prober_forward.1} parent=1 // pred_check_branch
      %337 = sbr.rel (0) target = $region29
    $region28: #{conv_prober_forward.1} parent=1 // pred_region
      %s339 = ssub.s32 32, 32
      %340 = vsyncadd [#allocation5], %s339
      %s342 = sshll.u32 [#allocation6], 4
      %s343 = int_to_ptr.vmem [resolvable:$true] %s342
      %345 = dma.vmem_to_hbm [thread:$0]  %s343, 32, %s3, [#allocation5]
    $region29: #{conv_prober_forward.1} parent=1 // pred_fallthru
      _
    // Predicated region
    $region30: #{conv_prober_forward.1} parent=1 // pred_check
      _
    $region31: #{conv_prober_forward.1} parent=1 // pred_check_branch
      %347 = sbr.rel (0) target = $region33
    $region32: #{conv_prober_forward.1} parent=1 // pred_region
      %348 = dma.done [#allocation5], 32
    $region33: #{conv_prober_forward.1} parent=1 // pred_fallthru
      _
    %349 = vsyncpa [#allocation4], 1
    %350 = vsyncpa [#allocation5], 1

</llo_original>
